<compile_context>
chip_gen: v6e
topology: v6e:2x2x1
jax: 0.10.0
libtpu: 0.0.40
codegen_flags: <defaults>
</compile_context>

<pallas_src>
import math
import functools

import jax
import jax.numpy as jnp
from jax import lax
from jax.experimental import pallas as pl
from jax.experimental.pallas import tpu as pltpu


def _round_up(x, m):
    return (x + m - 1) // m * m


# --------------------------------------------------------------------------
# Fused QKV projection kernel:  x @ [Wq*scale | Wk | Wv] + [bq*scale | bk | bv]
# --------------------------------------------------------------------------

def _qkv_proj_kernel(x_ref, w_ref, b_ref, o_ref):
    """One M-tile of x @ W_qkv + b_qkv (bf16 operands, f32 accumulation)."""
    acc = jnp.dot(x_ref[...], w_ref[...], preferred_element_type=jnp.float32)
    o_ref[...] = (acc + b_ref[...]).astype(o_ref.dtype)


def fused_qkv_projection(x2d, w_qkv, b_qkv):
    """(M, H) @ (H, 3H) + (3H,) -> (M, 3H) bf16 with a single fused matmul."""
    M, H = x2d.shape
    N = w_qkv.shape[1]

    # Row tiling: round small M to 16 (bf16 packs 16 rows/sublane tile); use
    # 512-row tiles for large M (~85% of HBM roofline vs ~63% at 256).
    if M <= 1024:
        tm = _round_up(M, 16)
    else:
        tm = 512
    Mp = _round_up(M, tm)

    xp = x2d.astype(jnp.bfloat16)
    if Mp != M:
        xp = jnp.pad(xp, ((0, Mp - M), (0, 0)))

    # The (H, 3H) weight block is grid-invariant; for big weights do not
    # double-buffer it (matters on v5e's 16 MiB scoped-VMEM default and on
    # v7x's 64 MiB physical VMEM).  Only applied when the weight is large.
    if H * N * 2 >= (4 << 20):          # >= 4 MiB of bf16 weight
        w_spec = pl.BlockSpec((H, N), lambda i: (0, 0),
                              pipeline_mode=pl.Buffered(1))
    else:
        w_spec = pl.BlockSpec((H, N), lambda i: (0, 0))

    out = pl.pallas_call(
        _qkv_proj_kernel,
        out_shape=jax.ShapeDtypeStruct((Mp, N), jnp.bfloat16),
        grid_spec=pltpu.PrefetchScalarGridSpec(
            num_scalar_prefetch=0,
            grid=(Mp // tm,),
            in_specs=[
                pl.BlockSpec((tm, H), lambda i: (i, 0)),   # activation tile
                w_spec,                                    # full fused weight
                pl.BlockSpec((1, N), lambda i: (0, 0)),    # fused bias
            ],
            out_specs=pl.BlockSpec((tm, N), lambda i: (i, 0)),
        ),
        compiler_params=pltpu.CompilerParams(
            dimension_semantics=("parallel",)),
    )(xp, w_qkv, b_qkv)
    return out[:M] if Mp != M else out


# --------------------------------------------------------------------------
# Fused attention kernel: all heads of one batch element per grid step.
#   QK^T -> softmax -> P@V, reading head slices straight from the (S, 3H)
#   projection slab and writing a lane-dense (S, H) context slab.
# --------------------------------------------------------------------------

def _attn_kernel(qkv_ref, o_ref, *, num_heads, head_dim):
    H = num_heads * head_dim
    # Static unroll over heads (num_heads is small and static).  The 1/sqrt(d)
    # scale is folded into the Q projection, so scores = q @ k^T directly.
    for h in range(num_heads):
        lo = h * head_dim
        hi = lo + head_dim
        q = qkv_ref[:, lo:hi]                  # (S, d) bf16, pre-scaled
        k = qkv_ref[:, H + lo:H + hi]          # (S, d) bf16
        v = qkv_ref[:, 2 * H + lo:2 * H + hi]  # (S, d) bf16

        # q @ k^T on the MXU with f32 accumulation.
        s = lax.dot_general(q, k, (((1,), (1,)), ((), ())),
                            preferred_element_type=jnp.float32)   # (S, S)
        m = jnp.max(s, axis=-1, keepdims=True)
        e = jnp.exp(s - m)                                        # (S, S) f32
        l = jnp.sum(e, axis=-1, keepdims=True)                    # (S, 1)
        # Normalize AFTER P@V: exact f32 divide on the small (S, d) context
        # instead of approx-reciprocal on the (S, S) probabilities.
        ctx = jnp.dot(e.astype(v.dtype), v,
                      preferred_element_type=jnp.float32)         # (S, d)
        ctx = ctx / l
        # Head h lands in columns [h*d, (h+1)*d) of the (S, H) output slab,
        # which is exactly permute(0,2,1,3)+view of the reference => no XLA
        # transpose afterwards.
        o_ref[:, lo:hi] = ctx.astype(o_ref.dtype)


def fused_attention(qkv, num_heads, head_dim):
    """qkv: (B, S, 3H) bf16 -> context (B, S, H) bf16."""
    B, S, threeH = qkv.shape
    H = num_heads * head_dim
    return pl.pallas_call(
        functools.partial(_attn_kernel, num_heads=num_heads,
                          head_dim=head_dim),
        out_shape=jax.ShapeDtypeStruct((B, S, H), jnp.bfloat16),
        grid_spec=pltpu.PrefetchScalarGridSpec(
            num_scalar_prefetch=0,
            grid=(B,),
            in_specs=[pl.BlockSpec((None, S, threeH), lambda b: (b, 0, 0))],
            out_specs=pl.BlockSpec((None, S, H), lambda b: (b, 0, 0)),
        ),
        compiler_params=pltpu.CompilerParams(
            dimension_semantics=("parallel",)),
    )(qkv)


# --------------------------------------------------------------------------
# Parameter prep (hoisted out of the per-call path) and module forward.
# --------------------------------------------------------------------------

def prepare_qkv_params(params, num_heads):
    """Fold 1/sqrt(d) into Q and concatenate Q/K/V weights once."""
    H = params["wq"].shape[0]
    d = H // num_heads
    scale = 1.0 / math.sqrt(d)
    w_qkv = jnp.concatenate(
        [params["wq"] * scale, params["wk"], params["wv"]],
        axis=1).astype(jnp.bfloat16)                               # (H, 3H)
    b_qkv = jnp.concatenate(
        [params["bq"] * scale, params["bk"], params["bv"]],
        axis=0).astype(jnp.float32).reshape(1, 3 * H)              # (1, 3H)
    return w_qkv, b_qkv


def bert_self_attention(hidden_states, w_qkv, b_qkv, *, num_heads):
    """Matches BERTSelfAttention.forward (inference; dropout = identity)."""
    B, S, H = hidden_states.shape
    assert H % num_heads == 0
    d = H // num_heads

    qkv = fused_qkv_projection(hidden_states.reshape(B * S, H), w_qkv, b_qkv)
    qkv = qkv.reshape(B, S, 3 * H)                 # free reshape, no transpose

    # TODO(synk): additive attention mask before softmax (module has none).
    ctx = fused_attention(qkv, num_heads, d)       # (B, S, H) bf16

    # Cast only to match the nn.Module's f32 output dtype; a full model would
    # keep bf16 and feed the next projection directly.
    return ctx.astype(jnp.float32)


# --------------------------------------------------------------------------
# Pure-JAX reference + deterministic parameter init
# --------------------------------------------------------------------------

def reference_attention(x, params, num_heads):
    B, S, H = x.shape
    d = H // num_heads

    def proj(w, b):
        t = x @ w + b
        return t.reshape(B, S, num_heads, d).transpose(0, 2, 1, 3)

    q = proj(params["wq"], params["bq"])
    k = proj(params["wk"], params["bk"])
    v = proj(params["wv"], params["bv"])
    s = jnp.einsum("bhqd,bhkd->bhqk", q, k) / math.sqrt(d)
    p = jax.nn.softmax(s, axis=-1)
    ctx = jnp.einsum("bhqk,bhkd->bhqd", p, v)
    return ctx.transpose(0, 2, 1, 3).reshape(B, S, H)


def init_params(key, hidden):
    ks = jax.random.split(key, 6)
    nrm = lambda k, shape: 0.02 * jax.random.normal(k, shape, jnp.float32)
    # Weights stored as (in_features, out_features), i.e. nn.Linear.weight.T.
    return dict(
        wq=nrm(ks[0], (hidden, hidden)), bq=nrm(ks[1], (hidden,)),
        wk=nrm(ks[2], (hidden, hidden)), bk=nrm(ks[3], (hidden,)),
        wv=nrm(ks[4], (hidden, hidden)), bv=nrm(ks[5], (hidden,)),
    )


# --------------------------------------------------------------------------

if __name__ == "__main__":
    key = jax.random.PRNGKey(0)
    pkey, xkey = jax.random.split(key)

    B, S, H, NUM_HEADS = 2, 8, 32, 4
    params = init_params(pkey, H)
    x = jax.random.normal(xkey, (B, S, H), jnp.float32)

    # Hoisted out of the per-call path: scale-fold + concat + bf16 cast.
    w_qkv, b_qkv = prepare_qkv_params(params, NUM_HEADS)

    fwd = jax.jit(functools.partial(bert_self_attention, num_heads=NUM_HEADS))
    out = jax.block_until_ready(fwd(x, w_qkv, b_qkv))

    assert out.shape == (B, S, H)
    assert bool(jnp.all(jnp.isfinite(out)))

    ref = reference_attention(x, params, NUM_HEADS)
    err = float(jnp.max(jnp.abs(out - ref)))
    # bf16 operands/outputs -> small deviation vs the f32 reference.
    assert err < 5e-2, f"max abs error {err}"

    print("KERNEL_OK")
</pallas_src>

<mosaic_0001>
module attributes {stable_mosaic.version = 11 : i64} {
  func.func @_qkv_proj_kernel(%arg0: i32, %arg1: memref<16x32xbf16, #tpu.memory_space<vmem>>, %arg2: memref<32x96xbf16, #tpu.memory_space<vmem>>, %arg3: memref<1x96xf32, #tpu.memory_space<vmem>>, %arg4: memref<16x96xbf16, #tpu.memory_space<vmem>>) attributes {dimension_semantics = [#tpu.dimension_semantics<parallel>], iteration_bounds = array<i64: 1>, scalar_prefetch = 0 : i64, scratch_operands = 0 : i64, tpu.core_type = #tpu.core_type<tc>, window_params = [{transform_indices = @transform_0, window_bounds = array<i64: 16, 32>}, {pipeline_mode = #tpu.pipeline_mode<synchronous>, transform_indices = @transform_1, window_bounds = array<i64: 32, 96>}, {pipeline_mode = #tpu.pipeline_mode<synchronous>, transform_indices = @transform_2, window_bounds = array<i64: 1, 96>}, {transform_indices = @transform_3, window_bounds = array<i64: 16, 96>}]} {
    %c0 = arith.constant 0 : index
    %c0_0 = arith.constant 0 : index
    %0 = vector.load %arg1[%c0, %c0_0] : memref<16x32xbf16, #tpu.memory_space<vmem>>, vector<16x32xbf16>
    %c0_1 = arith.constant 0 : index
    %c0_2 = arith.constant 0 : index
    %1 = vector.load %arg2[%c0_1, %c0_2] : memref<32x96xbf16, #tpu.memory_space<vmem>>, vector<32x96xbf16>
    %cst = arith.constant dense<0.000000e+00> : vector<16x96xf32>
    %2 = tpu.matmul %0, %1, %cst {dimension_numbers = #tpu.dot_dimension_numbers<[1], [0], [0], [1], [0, 0, 1, 1], [], []>} : vector<16x32xbf16>, vector<32x96xbf16>, vector<16x96xf32> -> vector<16x96xf32>
    %c0_3 = arith.constant 0 : index
    %c0_4 = arith.constant 0 : index
    %3 = vector.load %arg3[%c0_3, %c0_4] : memref<1x96xf32, #tpu.memory_space<vmem>>, vector<1x96xf32>
    %4 = vector.broadcast %3 : vector<1x96xf32> to vector<16x96xf32>
    %5 = arith.addf %2, %4 : vector<16x96xf32>
    %6 = arith.truncf %5 : vector<16x96xf32> to vector<16x96xbf16>
    %c0_5 = arith.constant 0 : index
    %c0_6 = arith.constant 0 : index
    %7 = vector.load %arg4[%c0_5, %c0_6] : memref<16x96xbf16, #tpu.memory_space<vmem>>, vector<16x96xbf16>
    tpu.vector_store %arg4[%c0_5, %c0_6], %6 {strides = array<i32>} : memref<16x96xbf16, #tpu.memory_space<vmem>>, vector<16x96xbf16>,
    return
  }
  func.func @transform_0(%arg0: i32) -> (i32, i32) {
    %c0_i32 = arith.constant 0 : i32
    %c0_i32_0 = arith.constant 0 : i32
    return %arg0, %c0_i32 : i32, i32
  }
  func.func @transform_1(%arg0: i32) -> (i32, i32) {
    %c0_i32 = arith.constant 0 : i32
    %c0_i32_0 = arith.constant 0 : i32
    %c0_i32_1 = arith.constant 0 : i32
    return %c0_i32, %c0_i32_0 : i32, i32
  }
  func.func @transform_2(%arg0: i32) -> (i32, i32) {
    %c0_i32 = arith.constant 0 : i32
    %c0_i32_0 = arith.constant 0 : i32
    %c0_i32_1 = arith.constant 0 : i32
    return %c0_i32, %c0_i32_0 : i32, i32
  }
  func.func @transform_3(%arg0: i32) -> (i32, i32) {
    %c0_i32 = arith.constant 0 : i32
    %c0_i32_0 = arith.constant 0 : i32
    return %arg0, %c0_i32 : i32, i32
  }
}

module attributes {stable_mosaic.version = 11 : i64} {
  func.func @_attn_kernel(%arg0: i32, %arg1: memref<1x8x96xbf16, #tpu.memory_space<vmem>>, %arg2: memref<1x8x32xbf16, #tpu.memory_space<vmem>>) attributes {dimension_semantics = [#tpu.dimension_semantics<parallel>], iteration_bounds = array<i64: 2>, scalar_prefetch = 0 : i64, scratch_operands = 0 : i64, tpu.core_type = #tpu.core_type<tc>, window_params = [{transform_indices = @transform_0, window_bounds = array<i64: 1, 8, 96>}, {transform_indices = @transform_1, window_bounds = array<i64: 1, 8, 32>}]} {
    %c0 = arith.constant 0 : index
    %c0_0 = arith.constant 0 : index
    %c0_1 = arith.constant 0 : index
    %0 = vector.load %arg1[%c0, %c0_0, %c0_1] : memref<1x8x96xbf16, #tpu.memory_space<vmem>>, vector<1x8x8xbf16>
    %1 = vector.shape_cast %0 : vector<1x8x8xbf16> to vector<8x8xbf16>
    %c0_2 = arith.constant 0 : index
    %c0_3 = arith.constant 0 : index
    %c32 = arith.constant 32 : index
    %2 = vector.load %arg1[%c0_2, %c0_3, %c32] : memref<1x8x96xbf16, #tpu.memory_space<vmem>>, vector<1x8x8xbf16>
    %3 = vector.shape_cast %2 : vector<1x8x8xbf16> to vector<8x8xbf16>
    %c0_4 = arith.constant 0 : index
    %c0_5 = arith.constant 0 : index
    %c64 = arith.constant 64 : index
    %4 = vector.load %arg1[%c0_4, %c0_5, %c64] : memref<1x8x96xbf16, #tpu.memory_space<vmem>>, vector<1x8x8xbf16>
    %5 = vector.shape_cast %4 : vector<1x8x8xbf16> to vector<8x8xbf16>
    %cst = arith.constant dense<0.000000e+00> : vector<8x8xf32>
    %6 = tpu.matmul %1, %3, %cst {dimension_numbers = #tpu.dot_dimension_numbers<[1], [1], [0], [0], [0, 0, 1, 0], [], []>} : vector<8x8xbf16>, vector<8x8xbf16>, vector<8x8xf32> -> vector<8x8xf32>
    %cst_6 = arith.constant dense<0xFF800000> : vector<8xf32>
    %7 = vector.multi_reduction <maximumf>, %6, %cst_6 [1] : vector<8x8xf32> to vector<8xf32>
    %8 = vector.shape_cast %7 : vector<8xf32> to vector<8x1xf32>
    %9 = vector.broadcast %8 : vector<8x1xf32> to vector<8x8xf32>
    %10 = arith.subf %6, %9 : vector<8x8xf32>
    %11 = math.exp %10 : vector<8x8xf32>
    %cst_7 = arith.constant dense<0.000000e+00> : vector<8xf32>
    %12 = vector.multi_reduction <add>, %11, %cst_7 [1] : vector<8x8xf32> to vector<8xf32>
    %13 = vector.shape_cast %12 : vector<8xf32> to vector<8x1xf32>
    %14 = arith.truncf %11 : vector<8x8xf32> to vector<8x8xbf16>
    %cst_8 = arith.constant dense<0.000000e+00> : vector<8x8xf32>
    %15 = tpu.matmul %14, %5, %cst_8 {dimension_numbers = #tpu.dot_dimension_numbers<[1], [0], [0], [1], [0, 0, 1, 1], [], []>} : vector<8x8xbf16>, vector<8x8xbf16>, vector<8x8xf32> -> vector<8x8xf32>
    %16 = vector.broadcast %13 : vector<8x1xf32> to vector<8x8xf32>
    %17 = arith.divf %15, %16 : vector<8x8xf32>
    %18 = arith.truncf %17 : vector<8x8xf32> to vector<8x8xbf16>
    %c0_9 = arith.constant 0 : index
    %c0_10 = arith.constant 0 : index
    %c0_11 = arith.constant 0 : index
    %19 = vector.load %arg2[%c0_9, %c0_10, %c0_11] : memref<1x8x32xbf16, #tpu.memory_space<vmem>>, vector<1x8x8xbf16>
    %20 = vector.shape_cast %19 : vector<1x8x8xbf16> to vector<8x8xbf16>
    %21 = vector.shape_cast %18 : vector<8x8xbf16> to vector<1x8x8xbf16>
    tpu.vector_store %arg2[%c0_9, %c0_10, %c0_11], %21 {strides = array<i32>} : memref<1x8x32xbf16, #tpu.memory_space<vmem>>, vector<1x8x8xbf16>,
    %c0_12 = arith.constant 0 : index
    %c0_13 = arith.constant 0 : index
    %c8 = arith.constant 8 : index
    %22 = vector.load %arg1[%c0_12, %c0_13, %c8] : memref<1x8x96xbf16, #tpu.memory_space<vmem>>, vector<1x8x8xbf16>
    %23 = vector.shape_cast %22 : vector<1x8x8xbf16> to vector<8x8xbf16>
    %c0_14 = arith.constant 0 : index
    %c0_15 = arith.constant 0 : index
    %c40 = arith.constant 40 : index
    %24 = vector.load %arg1[%c0_14, %c0_15, %c40] : memref<1x8x96xbf16, #tpu.memory_space<vmem>>, vector<1x8x8xbf16>
    %25 = vector.shape_cast %24 : vector<1x8x8xbf16> to vector<8x8xbf16>
    %c0_16 = arith.constant 0 : index
    %c0_17 = arith.constant 0 : index
    %c72 = arith.constant 72 : index
    %26 = vector.load %arg1[%c0_16, %c0_17, %c72] : memref<1x8x96xbf16, #tpu.memory_space<vmem>>, vector<1x8x8xbf16>
    %27 = vector.shape_cast %26 : vector<1x8x8xbf16> to vector<8x8xbf16>
    %cst_18 = arith.constant dense<0.000000e+00> : vector<8x8xf32>
    %28 = tpu.matmul %23, %25, %cst_18 {dimension_numbers = #tpu.dot_dimension_numbers<[1], [1], [0], [0], [0, 0, 1, 0], [], []>} : vector<8x8xbf16>, vector<8x8xbf16>, vector<8x8xf32> -> vector<8x8xf32>
    %cst_19 = arith.constant dense<0xFF800000> : vector<8xf32>
    %29 = vector.multi_reduction <maximumf>, %28, %cst_19 [1] : vector<8x8xf32> to vector<8xf32>
    %30 = vector.shape_cast %29 : vector<8xf32> to vector<8x1xf32>
    %31 = vector.broadcast %30 : vector<8x1xf32> to vector<8x8xf32>
    %32 = arith.subf %28, %31 : vector<8x8xf32>
    %33 = math.exp %32 : vector<8x8xf32>
    %cst_20 = arith.constant dense<0.000000e+00> : vector<8xf32>
    %34 = vector.multi_reduction <add>, %33, %cst_20 [1] : vector<8x8xf32> to vector<8xf32>
    %35 = vector.shape_cast %34 : vector<8xf32> to vector<8x1xf32>
    %36 = arith.truncf %33 : vector<8x8xf32> to vector<8x8xbf16>
    %cst_21 = arith.constant dense<0.000000e+00> : vector<8x8xf32>
    %37 = tpu.matmul %36, %27, %cst_21 {dimension_numbers = #tpu.dot_dimension_numbers<[1], [0], [0], [1], [0, 0, 1, 1], [], []>} : vector<8x8xbf16>, vector<8x8xbf16>, vector<8x8xf32> -> vector<8x8xf32>
    %38 = vector.broadcast %35 : vector<8x1xf32> to vector<8x8xf32>
    %39 = arith.divf %37, %38 : vector<8x8xf32>
    %40 = arith.truncf %39 : vector<8x8xf32> to vector<8x8xbf16>
    %c0_22 = arith.constant 0 : index
    %c0_23 = arith.constant 0 : index
    %c8_24 = arith.constant 8 : index
    %41 = vector.load %arg2[%c0_22, %c0_23, %c8_24] : memref<1x8x32xbf16, #tpu.memory_space<vmem>>, vector<1x8x8xbf16>
    %42 = vector.shape_cast %41 : vector<1x8x8xbf16> to vector<8x8xbf16>
    %43 = vector.shape_cast %40 : vector<8x8xbf16> to vector<1x8x8xbf16>
    tpu.vector_store %arg2[%c0_22, %c0_23, %c8_24], %43 {strides = array<i32>} : memref<1x8x32xbf16, #tpu.memory_space<vmem>>, vector<1x8x8xbf16>,
    %c0_25 = arith.constant 0 : index
    %c0_26 = arith.constant 0 : index
    %c16 = arith.constant 16 : index
    %44 = vector.load %arg1[%c0_25, %c0_26, %c16] : memref<1x8x96xbf16, #tpu.memory_space<vmem>>, vector<1x8x8xbf16>
    %45 = vector.shape_cast %44 : vector<1x8x8xbf16> to vector<8x8xbf16>
    %c0_27 = arith.constant 0 : index
    %c0_28 = arith.constant 0 : index
    %c48 = arith.constant 48 : index
    %46 = vector.load %arg1[%c0_27, %c0_28, %c48] : memref<1x8x96xbf16, #tpu.memory_space<vmem>>, vector<1x8x8xbf16>
    %47 = vector.shape_cast %46 : vector<1x8x8xbf16> to vector<8x8xbf16>
    %c0_29 = arith.constant 0 : index
    %c0_30 = arith.constant 0 : index
    %c80 = arith.constant 80 : index
    %48 = vector.load %arg1[%c0_29, %c0_30, %c80] : memref<1x8x96xbf16, #tpu.memory_space<vmem>>, vector<1x8x8xbf16>
    %49 = vector.shape_cast %48 : vector<1x8x8xbf16> to vector<8x8xbf16>
    %cst_31 = arith.constant dense<0.000000e+00> : vector<8x8xf32>
    %50 = tpu.matmul %45, %47, %cst_31 {dimension_numbers = #tpu.dot_dimension_numbers<[1], [1], [0], [0], [0, 0, 1, 0], [], []>} : vector<8x8xbf16>, vector<8x8xbf16>, vector<8x8xf32> -> vector<8x8xf32>
    %cst_32 = arith.constant dense<0xFF800000> : vector<8xf32>
    %51 = vector.multi_reduction <maximumf>, %50, %cst_32 [1] : vector<8x8xf32> to vector<8xf32>
    %52 = vector.shape_cast %51 : vector<8xf32> to vector<8x1xf32>
    %53 = vector.broadcast %52 : vector<8x1xf32> to vector<8x8xf32>
    %54 = arith.subf %50, %53 : vector<8x8xf32>
    %55 = math.exp %54 : vector<8x8xf32>
    %cst_33 = arith.constant dense<0.000000e+00> : vector<8xf32>
    %56 = vector.multi_reduction <add>, %55, %cst_33 [1] : vector<8x8xf32> to vector<8xf32>
    %57 = vector.shape_cast %56 : vector<8xf32> to vector<8x1xf32>
    %58 = arith.truncf %55 : vector<8x8xf32> to vector<8x8xbf16>
    %cst_34 = arith.constant dense<0.000000e+00> : vector<8x8xf32>
    %59 = tpu.matmul %58, %49, %cst_34 {dimension_numbers = #tpu.dot_dimension_numbers<[1], [0], [0], [1], [0, 0, 1, 1], [], []>} : vector<8x8xbf16>, vector<8x8xbf16>, vector<8x8xf32> -> vector<8x8xf32>
    %60 = vector.broadcast %57 : vector<8x1xf32> to vector<8x8xf32>
    %61 = arith.divf %59, %60 : vector<8x8xf32>
    %62 = arith.truncf %61 : vector<8x8xf32> to vector<8x8xbf16>
    %c0_35 = arith.constant 0 : index
    %c0_36 = arith.constant 0 : index
    %c16_37 = arith.constant 16 : index
    %63 = vector.load %arg2[%c0_35, %c0_36, %c16_37] : memref<1x8x32xbf16, #tpu.memory_space<vmem>>, vector<1x8x8xbf16>
    %64 = vector.shape_cast %63 : vector<1x8x8xbf16> to vector<8x8xbf16>
    %65 = vector.shape_cast %62 : vector<8x8xbf16> to vector<1x8x8xbf16>
    tpu.vector_store %arg2[%c0_35, %c0_36, %c16_37], %65 {strides = array<i32>} : memref<1x8x32xbf16, #tpu.memory_space<vmem>>, vector<1x8x8xbf16>,
    %c0_38 = arith.constant 0 : index
    %c0_39 = arith.constant 0 : index
    %c24 = arith.constant 24 : index
    %66 = vector.load %arg1[%c0_38, %c0_39, %c24] : memref<1x8x96xbf16, #tpu.memory_space<vmem>>, vector<1x8x8xbf16>
    %67 = vector.shape_cast %66 : vector<1x8x8xbf16> to vector<8x8xbf16>
    %c0_40 = arith.constant 0 : index
    %c0_41 = arith.constant 0 : index
    %c56 = arith.constant 56 : index
    %68 = vector.load %arg1[%c0_40, %c0_41, %c56] : memref<1x8x96xbf16, #tpu.memory_space<vmem>>, vector<1x8x8xbf16>
    %69 = vector.shape_cast %68 : vector<1x8x8xbf16> to vector<8x8xbf16>
    %c0_42 = arith.constant 0 : index
    %c0_43 = arith.constant 0 : index
    %c88 = arith.constant 88 : index
    %70 = vector.load %arg1[%c0_42, %c0_43, %c88] : memref<1x8x96xbf16, #tpu.memory_space<vmem>>, vector<1x8x8xbf16>
    %71 = vector.shape_cast %70 : vector<1x8x8xbf16> to vector<8x8xbf16>
    %cst_44 = arith.constant dense<0.000000e+00> : vector<8x8xf32>
    %72 = tpu.matmul %67, %69, %cst_44 {dimension_numbers = #tpu.dot_dimension_numbers<[1], [1], [0], [0], [0, 0, 1, 0], [], []>} : vector<8x8xbf16>, vector<8x8xbf16>, vector<8x8xf32> -> vector<8x8xf32>
    %cst_45 = arith.constant dense<0xFF800000> : vector<8xf32>
    %73 = vector.multi_reduction <maximumf>, %72, %cst_45 [1] : vector<8x8xf32> to vector<8xf32>
    %74 = vector.shape_cast %73 : vector<8xf32> to vector<8x1xf32>
    %75 = vector.broadcast %74 : vector<8x1xf32> to vector<8x8xf32>
    %76 = arith.subf %72, %75 : vector<8x8xf32>
    %77 = math.exp %76 : vector<8x8xf32>
    %cst_46 = arith.constant dense<0.000000e+00> : vector<8xf32>
    %78 = vector.multi_reduction <add>, %77, %cst_46 [1] : vector<8x8xf32> to vector<8xf32>
    %79 = vector.shape_cast %78 : vector<8xf32> to vector<8x1xf32>
    %80 = arith.truncf %77 : vector<8x8xf32> to vector<8x8xbf16>
    %cst_47 = arith.constant dense<0.000000e+00> : vector<8x8xf32>
    %81 = tpu.matmul %80, %71, %cst_47 {dimension_numbers = #tpu.dot_dimension_numbers<[1], [0], [0], [1], [0, 0, 1, 1], [], []>} : vector<8x8xbf16>, vector<8x8xbf16>, vector<8x8xf32> -> vector<8x8xf32>
    %82 = vector.broadcast %79 : vector<8x1xf32> to vector<8x8xf32>
    %83 = arith.divf %81, %82 : vector<8x8xf32>
    %84 = arith.truncf %83 : vector<8x8xf32> to vector<8x8xbf16>
    %c0_48 = arith.constant 0 : index
    %c0_49 = arith.constant 0 : index
    %c24_50 = arith.constant 24 : index
    %85 = vector.load %arg2[%c0_48, %c0_49, %c24_50] : memref<1x8x32xbf16, #tpu.memory_space<vmem>>, vector<1x8x8xbf16>
    %86 = vector.shape_cast %85 : vector<1x8x8xbf16> to vector<8x8xbf16>
    %87 = vector.shape_cast %84 : vector<8x8xbf16> to vector<1x8x8xbf16>
    tpu.vector_store %arg2[%c0_48, %c0_49, %c24_50], %87 {strides = array<i32>} : memref<1x8x32xbf16, #tpu.memory_space<vmem>>, vector<1x8x8xbf16>,
    return
  }
  func.func @transform_0(%arg0: i32) -> (i32, i32, i32) {
    %c0_i32 = arith.constant 0 : i32
    %c0_i32_0 = arith.constant 0 : i32
    %c0_i32_1 = arith.constant 0 : i32
    return %arg0, %c0_i32, %c0_i32_0 : i32, i32, i32
  }
  func.func @transform_1(%arg0: i32) -> (i32, i32, i32) {
    %c0_i32 = arith.constant 0 : i32
    %c0_i32_0 = arith.constant 0 : i32
    %c0_i32_1 = arith.constant 0 : i32
    return %arg0, %c0_i32, %c0_i32_0 : i32, i32, i32
  }
}

</mosaic_0001>

<llo_original>
// kernel: bert_self_attention.2
$region0: #{bert_self_attention.2}
  #allocation0 [shape = 'u32[]', space=smem, size = 0x4, offset = 0x4, fixed_abs, tag = 'smem constant byte address 0x4 - core index']
  #allocation1 [shape = 'u32[144,128]{1,0:T(1,128)}', space=vmem, size = 0x12000, scoped, tag = 'internal scratch']
  %s0 = inlined_call_operand.vmem [shape: bf16[16,32], index: 0, kind: input, shape index: {}]
  %s1 = inlined_call_operand.vmem [shape: bf16[32,96], index: 1, kind: input, shape index: {}]
  %s2 = inlined_call_operand.vmem [shape: f32[1,96], index: 2, kind: input, shape index: {}]
  %s3 = inlined_call_operand.vmem [shape: bf16[16,96], index: 3, kind: output, shape index: {}]
  %s4 = sld [smem:[#allocation0]]
  $region22: #{bert_self_attention.2} parent=0
    _
  %s6 = ssub.s32 1, %s4
  %s7 = scalar_select 0, %s6, %s4
  // Predicated region
  $region2: #{bert_self_attention.2} parent=0 // pred_check
    _
  $region3: #{bert_self_attention.2} parent=0 // pred_check_branch
    %9 = sbr.rel (0) target = $region5
  $region4: #{bert_self_attention.2} parent=0 // pred_region
    _
  $region5: #{bert_self_attention.2} parent=0 // pred_fallthru
    _
  // Predicated region
  $region6: #{bert_self_attention.2} parent=0 // pred_check
    _
  $region7: #{bert_self_attention.2} parent=0 // pred_check_branch
    %11 = sbr.rel (0) target = $region9
  $region8: #{bert_self_attention.2} parent=0 // pred_region
    _
  $region9: #{bert_self_attention.2} parent=0 // pred_fallthru
    _
  // Predicated region
  $region10: #{bert_self_attention.2} parent=0 // pred_check
    _
  $region11: #{bert_self_attention.2} parent=0 // pred_check_branch
    %13 = sbr.rel (0) target = $region13
  $region12: #{bert_self_attention.2} parent=0 // pred_region
    _
  $region13: #{bert_self_attention.2} parent=0 // pred_fallthru
    _
  %v15 = vld [vmem:[%s0] sm:$0xf]
  %v16 = vld [vmem:[%s0 + $0x4] sm:$0xf]
  %v17 = vld [vmem:[%s1] sm:$0xf]
  %v18 = vld [vmem:[%s1 + $0x4] sm:$0xf]
  %v19 = vld [vmem:[%s1 + $0x8] sm:$0xf]
  %v20 = vld [vmem:[%s1 + $0xc] sm:$0xf]
  %v21 = vld [vmem:[%s2] sm:$0x1]
  %v23 = vlaneseq
  %v24 = vshrl.u32 %v23, 7
  %v25 = vsub.s32 0, %v24
  %v26 = vrot.slane %v21, %v25
  %v30 = vunpack.c.l.b16 %v15
  %v31 = vunpack.c.l.b16 %v16
  %v32 = vpack.c.b16 %v31, %v30
  %v37 = vunpack.c.l.b16 %v17
  %v38 = vunpack.c.l.b16 %v18
  %v39 = vunpack.c.l.b16 %v19
  %v40 = vunpack.c.l.b16 %v20
  %v41 = vpack.c.b16 %v38, %v37
  %v42 = vpack.c.b16 %v40, %v39
  %vm45 = vcmask 261120
  %v47 = vsel %vm45, %v32, 0
  %49 = vmatprep.subr.bf16.mxu0 0
  %50 = vmatpush1.bf16.msra.mxu0 0
  %51 = vmatprep.subr.bf16.mxu0 0
  %52 = vmatpush1.bf16.msra.mxu0 0
  %53 = vmatprep.subr.bf16.mxu0 0
  %54 = vmatpush1.bf16.msra.mxu0 0
  %55 = vmatprep.subr.bf16.mxu0 0
  %56 = vmatpush1.bf16.msra.mxu0 0
  %57 = vmatprep.subr.bf16.mxu0 0
  %58 = vmatpush1.bf16.msra.mxu0 0
  %59 = vmatprep.subr.bf16.mxu0 0
  %60 = vmatpush1.bf16.msra.mxu0 0
  %61 = vmatprep.subr.bf16.mxu0 0
  %62 = vmatpush1.bf16.msra.mxu0 %v42
  %63 = vmatprep.subr.bf16.mxu0 0
  %64 = vmatpush1.bf16.msra.mxu0 %v41
  %65 = vmatprep.subr.bf16.mxu0 0
  %66 = vmatpush2.bf16.msra.mxu0 0
  %67 = vmatprep.subr.bf16.mxu0 0
  %68 = vmatpush2.bf16.msra.mxu0 0
  %69 = vmatprep.subr.bf16.mxu0 0
  %70 = vmatpush2.bf16.msra.mxu0 0
  %71 = vmatprep.subr.bf16.mxu0 0
  %72 = vmatpush2.bf16.msra.mxu0 0
  %73 = vmatprep.subr.bf16.mxu0 0
  %74 = vmatpush2.bf16.msra.mxu0 0
  %75 = vmatprep.subr.bf16.mxu0 0
  %76 = vmatpush2.bf16.msra.mxu0 0
  %77 = vmatprep.subr.bf16.mxu0 0
  %78 = vmatpush2.bf16.msra.mxu0 0
  %79 = vmatprep.subr.bf16.mxu0 0
  %80 = vmatpush2.bf16.msra.mxu0 0
  %81 = vmatprep.mubr.bf16.mxu0 0
  %82 = vmatmul.mubr.bf16.gmra.mxu0 %v47
  %v83 = vpop.f32.mrf.mxu0
  %v84 = vadd.f32 %v26, %v83
  %v85 = vpop.f32.mrf.mxu0
  %v86 = vpop.f32.mrf.mxu0
  %v87 = vadd.f32 %v26, %v86
  %v88 = vpop.f32.mrf.mxu0
  %89 = vdwg.mxu0
  %v90 = vpack.c.bf16 %v87, %v84
  %v92 = vunpack.c.l.b16 %v90
  %v93 = vunpack.c.h.b16 %v90
  %v94 = vpack.c.b16 %v92, %v92
  %v95 = vpack.c.b16 %v93, %v93
  %vm98 = vcmask 781312
  %99 = vst.msk [vmem:[%s3] sm:$0xf] %vm98, %v94
  %100 = vst.msk [vmem:[%s3 + $0x4] sm:$0xf] %vm98, %v95
  // Predicated region
  $region14: #{bert_self_attention.2} parent=0 // pred_check
    _
  $region15: #{bert_self_attention.2} parent=0 // pred_check_branch
    %102 = sbr.rel (0) target = $region17
  $region16: #{bert_self_attention.2} parent=0 // pred_region
    _
  $region17: #{bert_self_attention.2} parent=0 // pred_fallthru
    _
  // Predicated region
  $region18: #{bert_self_attention.2} parent=0 // pred_check
    _
  $region19: #{bert_self_attention.2} parent=0 // pred_check_branch
    %104 = sbr.rel (0) target = $region21
  $region20: #{bert_self_attention.2} parent=0 // pred_region
    _
  $region21: #{bert_self_attention.2} parent=0 // pred_fallthru
    _

// kernel: bert_self_attention.3
$region0: #{bert_self_attention.3}
  #allocation0 [shape = 'u32[]', space=smem, size = 0x4, offset = 0x4, fixed_abs, tag = 'smem constant byte address 0x4 - core index']
  #allocation1 [shape = 'u32[144,128]{1,0:T(1,128)}', space=vmem, size = 0x12000, scoped, tag = 'internal scratch']
  %s0 = inlined_call_operand.vmem [shape: bf16[2,8,96], index: 0, kind: input, shape index: {}]
  %s1 = inlined_call_operand.vmem [shape: bf16[2,8,32], index: 1, kind: output, shape index: {}]
  %s2 = sld [smem:[#allocation0]]
  $region37: #{bert_self_attention.3} parent=0
    _
  %s4 = ssub.s32 1, %s2
  %s5 = scalar_select 0, %s4, %s2
  loop: start=0, step=1, limit=4
  $region2: #{bert_self_attention.3} parent=0 // loop_pre_header
    _
  $region3: #{bert_self_attention.3} parent=0 // loop_header
    %s7 = sphi 0, %s11
    %p8 = scmp.ge.s32.totalorder %s7, 4
    %s17 = sphi 0, %s19
    %s20 = sphi 0, %s17
    %s21 = sphi 0, %s20
    %s37 = sphi 0, %s21
    %s43 = sphi 0, %s45
    %s46 = sphi 0, %s43
    %s47 = sphi 0, %s46
    %s63 = sphi 0, %s47
  $region4: #{bert_self_attention.3} parent=0 // loop_header_branch
    %10 = sbr.rel (%p8) target = $region8
  $region5: #{bert_self_attention.3} parent=0 // loop_body
    %s12 = ssub.s32 %s7, 1
    %s13 = ssub.s32 %s7, 2
    %s14 = sadd.s32 %s7, 1
    %s15 = ssub.s32 %s7, %s14
    %p16 = scmp.eq.s32.totalorder %s15, 0
    %s18 = sadd.s32 %s17, 1
    %s19 = scalar_select %p16, %s17, %s18
    %p22 = pneg %p16
    %p23 = scmp.eq.s32.totalorder %s7, 1
    %p24 = por %p22, %p23
    %p25 = scmp.ne.s32.totalorder %s17, %s20
    %p26 = scmp.eq.s32.totalorder %s7, 0
    %p27 = por %p25, %p26
    %p28 = scmp.ne.s32.totalorder %s17, %s20
    %p29 = scmp.eq.s32.totalorder %s12, 1
    %p30 = por %p28, %p29
    %p31 = scmp.ne.s32.totalorder %s20, %s21
    %p32 = scmp.eq.s32.totalorder %s12, 0
    %p33 = por %p31, %p32
    %p34 = scmp.ne.s32.totalorder %s20, %s21
    %p35 = scmp.eq.s32.totalorder %s13, 1
    %p36 = por %p34, %p35
    %p38 = scmp.ne.s32.totalorder %s21, %s37
    %p39 = scmp.eq.s32.totalorder %s13, 0
    %p40 = por %p38, %p39
    %s41 = ssub.s32 %s7, %s14
    %p42 = scmp.eq.s32.totalorder %s41, 0
    %s44 = sadd.s32 %s43, 1
    %s45 = scalar_select %p42, %s43, %s44
    %p48 = pneg %p42
    %p49 = scmp.eq.s32.totalorder %s7, 1
    %p50 = por %p48, %p49
    %p51 = scmp.ne.s32.totalorder %s43, %s46
    %p52 = scmp.eq.s32.totalorder %s7, 0
    %p53 = por %p51, %p52
    %p54 = scmp.ne.s32.totalorder %s43, %s46
    %p55 = scmp.eq.s32.totalorder %s12, 1
    %p56 = por %p54, %p55
    %p57 = scmp.ne.s32.totalorder %s46, %s47
    %p58 = scmp.eq.s32.totalorder %s12, 0
    %p59 = por %p57, %p58
    %p60 = scmp.ne.s32.totalorder %s46, %s47
    %p61 = scmp.eq.s32.totalorder %s13, 1
    %p62 = por %p60, %p61
    %p64 = scmp.ne.s32.totalorder %s47, %s63
    %p65 = scmp.eq.s32.totalorder %s13, 0
    %p66 = por %p64, %p65
    %p67 = scmp.le.s32.totalorder 1, %s7
    %p68 = scmp.lt.s32.totalorder %s7, 3
    %p69 = pnand %p67, %p68
    %p70 = pneg %p69
    // Predicated region
    $region9: #{bert_self_attention.3} parent=5 // pred_check
      _
    $region10: #{bert_self_attention.3} parent=5 // pred_check_branch
      %72 = sbr.rel (%p69) target = $region12
    $region11: #{bert_self_attention.3} parent=5 // pred_region
      %s73 = ssub.s32 %s7, 1
    $region12: #{bert_self_attention.3} parent=5 // pred_fallthru
      _
    %p74 = scmp.lt.s32.totalorder %s7, 2
    // Predicated region
    $region13: #{bert_self_attention.3} parent=5 // pred_check
      %p75 = pneg %p74
    $region14: #{bert_self_attention.3} parent=5 // pred_check_branch
      %77 = sbr.rel (%p75) target = $region16
    $region15: #{bert_self_attention.3} parent=5 // pred_region
      // Predicated region
      $region17: #{bert_self_attention.3} parent=15 // pred_check
        %p78 = pneg %p27
      $region18: #{bert_self_attention.3} parent=15 // pred_check_branch
        %80 = sbr.rel (%p78) target = $region20
      $region19: #{bert_self_attention.3} parent=15 // pred_region
        %p81 = scmp.lt.s32.totalorder %s7, 1
        %s82 = scalar_select %p81, %s7, 1
        %s83 = smul.addr %s82, 4
        %s84 = scalar_lea.vmem %s0, %s83
      $region20: #{bert_self_attention.3} parent=15 // pred_fallthru
        _
    $region16: #{bert_self_attention.3} parent=5 // pred_fallthru
      _
    %p85 = scmp.le.s32.totalorder 1, %s7
    %p86 = scmp.lt.s32.totalorder %s7, 3
    %p87 = pnand %p85, %p86
    %p88 = pneg %p87
    // Predicated region
    $region21: #{bert_self_attention.3} parent=5 // pred_check
      _
    $region22: #{bert_self_attention.3} parent=5 // pred_check_branch
      %90 = sbr.rel (%p87) target = $region24
    $region23: #{bert_self_attention.3} parent=5 // pred_region
      %s91 = ssub.s32 %s7, 1
      %p92 = scmp.lt.s32.totalorder %s12, 1
      %s93 = scalar_select %p92, %s12, 1
      %s94 = smul.addr %s93, 4
      %s95 = scalar_lea.vmem %s0, %s94
      %p96 = pneg %p33
      %p97 = pneg %p30
      %p98 = pneg %p59
      %p99 = pneg %p56
      %p100 = scmp.lt.s32.totalorder %s12, 1
      %s101 = scalar_select %p100, %s12, 1
      %s102 = smul.addr %s101, 4
      %s103 = scalar_lea.vmem %s1, %s102
      %p104 = scmp.lt.s32.totalorder %s12, 1
      %s105 = scalar_select %p104, %s12, 1
      %s106 = smul.addr %s105, 4
      %s107 = scalar_lea.vmem %s0, %s106
      %p108 = scmp.lt.s32.totalorder %s12, 1
      %s109 = scalar_select %p108, %s12, 1
      %s110 = smul.addr %s109, 4
      %s111 = scalar_lea.vmem %s1, %s110
      %v113 = vld [vmem:[%s107] sm:$0xf]
      %v115 = vunpack.c.l.b16 %v113
      %v116 = vpack.c.b16 %v115, %v115
      %117 = vrot.lane.b32.xlu0 %v116, 96
      %v118 = vpop.permute.xlu0 %117
      %vm119 = vcmask 64512
      %v121 = vsel %vm119, %v113, 0
      %v124 = vsel %vm119, %v118, 0
      %126 = vmatprep.subr.bf16.mxu0 0
      %127 = vmatpush1.bf16.xpose.msra.mxu0 0
      %128 = vmatprep.subr.bf16.mxu0 0
      %129 = vmatpush1.bf16.xpose.msra.mxu0 0
      %130 = vmatprep.subr.bf16.mxu0 0
      %131 = vmatpush1.bf16.xpose.msra.mxu0 0
      %132 = vmatprep.subr.bf16.mxu0 0
      %133 = vmatpush1.bf16.xpose.msra.mxu0 0
      %134 = vmatprep.subr.bf16.mxu0 0
      %135 = vmatpush1.bf16.xpose.msra.mxu0 0
      %136 = vmatprep.subr.bf16.mxu0 0
      %137 = vmatpush1.bf16.xpose.msra.mxu0 0
      %138 = vmatprep.subr.bf16.mxu0 0
      %139 = vmatpush1.bf16.xpose.msra.mxu0 0
      %140 = vmatprep.subr.bf16.mxu0 0
      %141 = vmatpush1.bf16.xpose.msra.mxu0 %v124
      %142 = vmatprep.subr.bf16.mxu0 0
      %143 = vmatpush2.bf16.xpose.msra.mxu0 0
      %144 = vmatprep.subr.bf16.mxu0 0
      %145 = vmatpush2.bf16.xpose.msra.mxu0 0
      %146 = vmatprep.subr.bf16.mxu0 0
      %147 = vmatpush2.bf16.xpose.msra.mxu0 0
      %148 = vmatprep.subr.bf16.mxu0 0
      %149 = vmatpush2.bf16.xpose.msra.mxu0 0
      %150 = vmatprep.subr.bf16.mxu0 0
      %151 = vmatpush2.bf16.xpose.msra.mxu0 0
      %152 = vmatprep.subr.bf16.mxu0 0
      %153 = vmatpush2.bf16.xpose.msra.mxu0 0
      %154 = vmatprep.subr.bf16.mxu0 0
      %155 = vmatpush2.bf16.xpose.msra.mxu0 0
      %156 = vmatprep.subr.bf16.mxu0 0
      %157 = vmatpush2.bf16.xpose.msra.mxu0 0
      %158 = vmatprep.mubr.bf16.mxu0 0
      %159 = vmatmul.mubr.bf16.gmra.mxu0 %v121
      %v160 = vpop.f32.mrf.mxu0
      %v161 = vadd.f32 0.0, %v160
      %v162 = vpop.f32.mrf.mxu0
      %v163 = vpop.f32.mrf.mxu0
      %v164 = vpop.f32.mrf.mxu0
      %165 = vdwg.mxu0
      %v166 = vsel %vm119, %v161, -inf
      %167 = vmax.xlane.f32.xlu0 %v166
      %v168 = vpop.xlane.xlu0 %167
      %v169 = vsub.f32 %v161, %v168
      %v170 = vmul.f32 %v169, 1.442695
      %v171 = vpow.pop %v170
      %v172 = vsel %vm119, %v171, 0.0
      %173 = vadd.xlane.f32.xlu0 %v172
      %v174 = vpop.xlane.xlu0 %173
      %v175 = vpack.c.bf16 %v171, %v171
      %176 = vrot.lane.b32.xlu0 %v116, 64
      %v177 = vpop.permute.xlu0 %176
      %v179 = vsel %vm119, %v175, 0
      %vm181 = vcmask 1043456
      %v183 = vsel %vm181, %v177, 0
      %185 = vmatprep.subr.bf16.mxu0 0
      %186 = vmatpush1.bf16.msra.mxu0 0
      %187 = vmatprep.subr.bf16.mxu0 0
      %188 = vmatpush1.bf16.msra.mxu0 0
      %189 = vmatprep.subr.bf16.mxu0 0
      %190 = vmatpush1.bf16.msra.mxu0 0
      %191 = vmatprep.subr.bf16.mxu0 0
      %192 = vmatpush1.bf16.msra.mxu0 0
      %193 = vmatprep.subr.bf16.mxu0 0
      %194 = vmatpush1.bf16.msra.mxu0 0
      %195 = vmatprep.subr.bf16.mxu0 0
      %196 = vmatpush1.bf16.msra.mxu0 0
      %197 = vmatprep.subr.bf16.mxu0 0
      %198 = vmatpush1.bf16.msra.mxu0 0
      %199 = vmatprep.subr.bf16.mxu0 0
      %200 = vmatpush1.bf16.msra.mxu0 %v183
      %201 = vmatprep.subr.bf16.mxu0 0
      %202 = vmatpush2.bf16.msra.mxu0 0
      %203 = vmatprep.subr.bf16.mxu0 0
      %204 = vmatpush2.bf16.msra.mxu0 0
      %205 = vmatprep.subr.bf16.mxu0 0
      %206 = vmatpush2.bf16.msra.mxu0 0
      %207 = vmatprep.subr.bf16.mxu0 0
      %208 = vmatpush2.bf16.msra.mxu0 0
      %209 = vmatprep.subr.bf16.mxu0 0
      %210 = vmatpush2.bf16.msra.mxu0 0
      %211 = vmatprep.subr.bf16.mxu0 0
      %212 = vmatpush2.bf16.msra.mxu0 0
      %213 = vmatprep.subr.bf16.mxu0 0
      %214 = vmatpush2.bf16.msra.mxu0 0
      %215 = vmatprep.subr.bf16.mxu0 0
      %216 = vmatpush2.bf16.msra.mxu0 0
      %217 = vmatprep.mubr.bf16.mxu0 0
      %218 = vmatmul.mubr.bf16.gmra.mxu0 %v179
      %v219 = vpop.f32.mrf.mxu0
      %v220 = vadd.f32 0.0, %v219
      %v221 = vpop.f32.mrf.mxu0
      %v222 = vpop.f32.mrf.mxu0
      %v223 = vpop.f32.mrf.mxu0
      %224 = vdwg.mxu0
      %v225 = vrcp.pop %v174
      %v226 = vmul.f32 %v220, %v225
      %v227 = vpack.c.bf16 %v226, %v226
      %vm228 = vcmask 60416
      %229 = vst.msk [vmem:[%s111] sm:$0xf] %vm228, %v227
      %v230 = vld [vmem:[%s107] sm:$0xf]
      %v232 = vunpack.c.l.b16 %v230
      %v233 = vpack.c.b16 %v232, %v232
      %234 = vrot.lane.b32.xlu0 %v233, 120
      %v235 = vpop.permute.xlu0 %234
      %236 = vrot.lane.b32.xlu0 %v233, 88
      %v237 = vpop.permute.xlu0 %236
      %v239 = vsel %vm119, %v235, 0
      %v242 = vsel %vm119, %v237, 0
      %244 = vmatprep.subr.bf16.mxu0 0
      %245 = vmatpush1.bf16.xpose.msra.mxu0 0
      %246 = vmatprep.subr.bf16.mxu0 0
      %247 = vmatpush1.bf16.xpose.msra.mxu0 0
      %248 = vmatprep.subr.bf16.mxu0 0
      %249 = vmatpush1.bf16.xpose.msra.mxu0 0
      %250 = vmatprep.subr.bf16.mxu0 0
      %251 = vmatpush1.bf16.xpose.msra.mxu0 0
      %252 = vmatprep.subr.bf16.mxu0 0
      %253 = vmatpush1.bf16.xpose.msra.mxu0 0
      %254 = vmatprep.subr.bf16.mxu0 0
      %255 = vmatpush1.bf16.xpose.msra.mxu0 0
      %256 = vmatprep.subr.bf16.mxu0 0
      %257 = vmatpush1.bf16.xpose.msra.mxu0 0
      %258 = vmatprep.subr.bf16.mxu0 0
      %259 = vmatpush1.bf16.xpose.msra.mxu0 %v242
      %260 = vmatprep.subr.bf16.mxu0 0
      %261 = vmatpush2.bf16.xpose.msra.mxu0 0
      %262 = vmatprep.subr.bf16.mxu0 0
      %263 = vmatpush2.bf16.xpose.msra.mxu0 0
      %264 = vmatprep.subr.bf16.mxu0 0
      %265 = vmatpush2.bf16.xpose.msra.mxu0 0
      %266 = vmatprep.subr.bf16.mxu0 0
      %267 = vmatpush2.bf16.xpose.msra.mxu0 0
      %268 = vmatprep.subr.bf16.mxu0 0
      %269 = vmatpush2.bf16.xpose.msra.mxu0 0
      %270 = vmatprep.subr.bf16.mxu0 0
      %271 = vmatpush2.bf16.xpose.msra.mxu0 0
      %272 = vmatprep.subr.bf16.mxu0 0
      %273 = vmatpush2.bf16.xpose.msra.mxu0 0
      %274 = vmatprep.subr.bf16.mxu0 0
      %275 = vmatpush2.bf16.xpose.msra.mxu0 0
      %276 = vmatprep.mubr.bf16.mxu0 0
      %277 = vmatmul.mubr.bf16.gmra.mxu0 %v239
      %v278 = vpop.f32.mrf.mxu0
      %v279 = vadd.f32 0.0, %v278
      %v280 = vpop.f32.mrf.mxu0
      %v281 = vpop.f32.mrf.mxu0
      %v282 = vpop.f32.mrf.mxu0
      %283 = vdwg.mxu0
      %v284 = vsel %vm119, %v279, -inf
      %285 = vmax.xlane.f32.xlu0 %v284
      %v286 = vpop.xlane.xlu0 %285
      %v287 = vsub.f32 %v279, %v286
      %v288 = vmul.f32 %v287, 1.442695
      %v289 = vpow.pop %v288
      %v290 = vsel %vm119, %v289, 0.0
      %291 = vadd.xlane.f32.xlu0 %v290
      %v292 = vpop.xlane.xlu0 %291
      %v293 = vpack.c.bf16 %v289, %v289
      %294 = vrot.lane.b32.xlu0 %v233, 56
      %v295 = vpop.permute.xlu0 %294
      %v297 = vsel %vm119, %v293, 0
      %v300 = vsel %vm181, %v295, 0
      %302 = vmatprep.subr.bf16.mxu0 0
      %303 = vmatpush1.bf16.msra.mxu0 0
      %304 = vmatprep.subr.bf16.mxu0 0
      %305 = vmatpush1.bf16.msra.mxu0 0
      %306 = vmatprep.subr.bf16.mxu0 0
      %307 = vmatpush1.bf16.msra.mxu0 0
      %308 = vmatprep.subr.bf16.mxu0 0
      %309 = vmatpush1.bf16.msra.mxu0 0
      %310 = vmatprep.subr.bf16.mxu0 0
      %311 = vmatpush1.bf16.msra.mxu0 0
      %312 = vmatprep.subr.bf16.mxu0 0
      %313 = vmatpush1.bf16.msra.mxu0 0
      %314 = vmatprep.subr.bf16.mxu0 0
      %315 = vmatpush1.bf16.msra.mxu0 0
      %316 = vmatprep.subr.bf16.mxu0 0
      %317 = vmatpush1.bf16.msra.mxu0 %v300
      %318 = vmatprep.subr.bf16.mxu0 0
      %319 = vmatpush2.bf16.msra.mxu0 0
      %320 = vmatprep.subr.bf16.mxu0 0
      %321 = vmatpush2.bf16.msra.mxu0 0
      %322 = vmatprep.subr.bf16.mxu0 0
      %323 = vmatpush2.bf16.msra.mxu0 0
      %324 = vmatprep.subr.bf16.mxu0 0
      %325 = vmatpush2.bf16.msra.mxu0 0
      %326 = vmatprep.subr.bf16.mxu0 0
      %327 = vmatpush2.bf16.msra.mxu0 0
      %328 = vmatprep.subr.bf16.mxu0 0
      %329 = vmatpush2.bf16.msra.mxu0 0
      %330 = vmatprep.subr.bf16.mxu0 0
      %331 = vmatpush2.bf16.msra.mxu0 0
      %332 = vmatprep.subr.bf16.mxu0 0
      %333 = vmatpush2.bf16.msra.mxu0 0
      %334 = vmatprep.mubr.bf16.mxu0 0
      %335 = vmatmul.mubr.bf16.gmra.mxu0 %v297
      %v336 = vpop.f32.mrf.mxu0
      %v337 = vadd.f32 0.0, %v336
      %v338 = vpop.f32.mrf.mxu0
      %v339 = vpop.f32.mrf.mxu0
      %v340 = vpop.f32.mrf.mxu0
      %341 = vdwg.mxu0
      %v342 = vrcp.pop %v292
      %v343 = vmul.f32 %v337, %v342
      %v344 = vpack.c.bf16 %v343, %v343
      %v346 = vunpack.c.l.b16 %v344
      %v347 = vpack.c.b16 %v346, %v346
      %348 = vrot.lane.b32.xlu0 %v347, 8
      %v349 = vpop.permute.xlu0 %348
      %vm351 = vcmask 126016
      %352 = vst.msk [vmem:[%s111] sm:$0xf] %vm351, %v349
      %v353 = vld [vmem:[%s107] sm:$0xf]
      %v355 = vunpack.c.l.b16 %v353
      %v356 = vpack.c.b16 %v355, %v355
      %357 = vrot.lane.b32.xlu0 %v356, 112
      %v358 = vpop.permute.xlu0 %357
      %359 = vrot.lane.b32.xlu0 %v356, 80
      %v360 = vpop.permute.xlu0 %359
      %v362 = vsel %vm119, %v358, 0
      %v365 = vsel %vm119, %v360, 0
      %367 = vmatprep.subr.bf16.mxu0 0
      %368 = vmatpush1.bf16.xpose.msra.mxu0 0
      %369 = vmatprep.subr.bf16.mxu0 0
      %370 = vmatpush1.bf16.xpose.msra.mxu0 0
      %371 = vmatprep.subr.bf16.mxu0 0
      %372 = vmatpush1.bf16.xpose.msra.mxu0 0
      %373 = vmatprep.subr.bf16.mxu0 0
      %374 = vmatpush1.bf16.xpose.msra.mxu0 0
      %375 = vmatprep.subr.bf16.mxu0 0
      %376 = vmatpush1.bf16.xpose.msra.mxu0 0
      %377 = vmatprep.subr.bf16.mxu0 0
      %378 = vmatpush1.bf16.xpose.msra.mxu0 0
      %379 = vmatprep.subr.bf16.mxu0 0
      %380 = vmatpush1.bf16.xpose.msra.mxu0 0
      %381 = vmatprep.subr.bf16.mxu0 0
      %382 = vmatpush1.bf16.xpose.msra.mxu0 %v365
      %383 = vmatprep.subr.bf16.mxu0 0
      %384 = vmatpush2.bf16.xpose.msra.mxu0 0
      %385 = vmatprep.subr.bf16.mxu0 0
      %386 = vmatpush2.bf16.xpose.msra.mxu0 0
      %387 = vmatprep.subr.bf16.mxu0 0
      %388 = vmatpush2.bf16.xpose.msra.mxu0 0
      %389 = vmatprep.subr.bf16.mxu0 0
      %390 = vmatpush2.bf16.xpose.msra.mxu0 0
      %391 = vmatprep.subr.bf16.mxu0 0
      %392 = vmatpush2.bf16.xpose.msra.mxu0 0
      %393 = vmatprep.subr.bf16.mxu0 0
      %394 = vmatpush2.bf16.xpose.msra.mxu0 0
      %395 = vmatprep.subr.bf16.mxu0 0
      %396 = vmatpush2.bf16.xpose.msra.mxu0 0
      %397 = vmatprep.subr.bf16.mxu0 0
      %398 = vmatpush2.bf16.xpose.msra.mxu0 0
      %399 = vmatprep.mubr.bf16.mxu0 0
      %400 = vmatmul.mubr.bf16.gmra.mxu0 %v362
      %v401 = vpop.f32.mrf.mxu0
      %v402 = vadd.f32 0.0, %v401
      %v403 = vpop.f32.mrf.mxu0
      %v404 = vpop.f32.mrf.mxu0
      %v405 = vpop.f32.mrf.mxu0
      %406 = vdwg.mxu0
      %v407 = vsel %vm119, %v402, -inf
      %408 = vmax.xlane.f32.xlu0 %v407
      %v409 = vpop.xlane.xlu0 %408
      %v410 = vsub.f32 %v402, %v409
      %v411 = vmul.f32 %v410, 1.442695
      %v412 = vpow.pop %v411
      %v413 = vsel %vm119, %v412, 0.0
      %414 = vadd.xlane.f32.xlu0 %v413
      %v415 = vpop.xlane.xlu0 %414
      %v416 = vpack.c.bf16 %v412, %v412
      %417 = vrot.lane.b32.xlu0 %v356, 48
      %v418 = vpop.permute.xlu0 %417
      %v420 = vsel %vm119, %v416, 0
      %v423 = vsel %vm181, %v418, 0
      %425 = vmatprep.subr.bf16.mxu0 0
      %426 = vmatpush1.bf16.msra.mxu0 0
      %427 = vmatprep.subr.bf16.mxu0 0
      %428 = vmatpush1.bf16.msra.mxu0 0
      %429 = vmatprep.subr.bf16.mxu0 0
      %430 = vmatpush1.bf16.msra.mxu0 0
      %431 = vmatprep.subr.bf16.mxu0 0
      %432 = vmatpush1.bf16.msra.mxu0 0
      %433 = vmatprep.subr.bf16.mxu0 0
      %434 = vmatpush1.bf16.msra.mxu0 0
      %435 = vmatprep.subr.bf16.mxu0 0
      %436 = vmatpush1.bf16.msra.mxu0 0
      %437 = vmatprep.subr.bf16.mxu0 0
      %438 = vmatpush1.bf16.msra.mxu0 0
      %439 = vmatprep.subr.bf16.mxu0 0
      %440 = vmatpush1.bf16.msra.mxu0 %v423
      %441 = vmatprep.subr.bf16.mxu0 0
      %442 = vmatpush2.bf16.msra.mxu0 0
      %443 = vmatprep.subr.bf16.mxu0 0
      %444 = vmatpush2.bf16.msra.mxu0 0
      %445 = vmatprep.subr.bf16.mxu0 0
      %446 = vmatpush2.bf16.msra.mxu0 0
      %447 = vmatprep.subr.bf16.mxu0 0
      %448 = vmatpush2.bf16.msra.mxu0 0
      %449 = vmatprep.subr.bf16.mxu0 0
      %450 = vmatpush2.bf16.msra.mxu0 0
      %451 = vmatprep.subr.bf16.mxu0 0
      %452 = vmatpush2.bf16.msra.mxu0 0
      %453 = vmatprep.subr.bf16.mxu0 0
      %454 = vmatpush2.bf16.msra.mxu0 0
      %455 = vmatprep.subr.bf16.mxu0 0
      %456 = vmatpush2.bf16.msra.mxu0 0
      %457 = vmatprep.mubr.bf16.mxu0 0
      %458 = vmatmul.mubr.bf16.gmra.mxu0 %v420
      %v459 = vpop.f32.mrf.mxu0
      %v460 = vadd.f32 0.0, %v459
      %v461 = vpop.f32.mrf.mxu0
      %v462 = vpop.f32.mrf.mxu0
      %v463 = vpop.f32.mrf.mxu0
      %464 = vdwg.mxu0
      %v465 = vrcp.pop %v415
      %v466 = vmul.f32 %v460, %v465
      %v467 = vpack.c.bf16 %v466, %v466
      %v469 = vunpack.c.l.b16 %v467
      %v470 = vpack.c.b16 %v469, %v469
      %471 = vrot.lane.b32.xlu0 %v470, 16
      %v472 = vpop.permute.xlu0 %471
      %vm474 = vcmask 191616
      %475 = vst.msk [vmem:[%s111] sm:$0xf] %vm474, %v472
      %v476 = vld [vmem:[%s107] sm:$0xf]
      %v478 = vunpack.c.l.b16 %v476
      %v479 = vpack.c.b16 %v478, %v478
      %480 = vrot.lane.b32.xlu0 %v479, 104
      %v481 = vpop.permute.xlu0 %480
      %482 = vrot.lane.b32.xlu0 %v479, 72
      %v483 = vpop.permute.xlu0 %482
      %v485 = vsel %vm119, %v481, 0
      %v488 = vsel %vm119, %v483, 0
      %490 = vmatprep.subr.bf16.mxu0 0
      %491 = vmatpush1.bf16.xpose.msra.mxu0 0
      %492 = vmatprep.subr.bf16.mxu0 0
      %493 = vmatpush1.bf16.xpose.msra.mxu0 0
      %494 = vmatprep.subr.bf16.mxu0 0
      %495 = vmatpush1.bf16.xpose.msra.mxu0 0
      %496 = vmatprep.subr.bf16.mxu0 0
      %497 = vmatpush1.bf16.xpose.msra.mxu0 0
      %498 = vmatprep.subr.bf16.mxu0 0
      %499 = vmatpush1.bf16.xpose.msra.mxu0 0
      %500 = vmatprep.subr.bf16.mxu0 0
      %501 = vmatpush1.bf16.xpose.msra.mxu0 0
      %502 = vmatprep.subr.bf16.mxu0 0
      %503 = vmatpush1.bf16.xpose.msra.mxu0 0
      %504 = vmatprep.subr.bf16.mxu0 0
      %505 = vmatpush1.bf16.xpose.msra.mxu0 %v488
      %506 = vmatprep.subr.bf16.mxu0 0
      %507 = vmatpush2.bf16.xpose.msra.mxu0 0
      %508 = vmatprep.subr.bf16.mxu0 0
      %509 = vmatpush2.bf16.xpose.msra.mxu0 0
      %510 = vmatprep.subr.bf16.mxu0 0
      %511 = vmatpush2.bf16.xpose.msra.mxu0 0
      %512 = vmatprep.subr.bf16.mxu0 0
      %513 = vmatpush2.bf16.xpose.msra.mxu0 0
      %514 = vmatprep.subr.bf16.mxu0 0
      %515 = vmatpush2.bf16.xpose.msra.mxu0 0
      %516 = vmatprep.subr.bf16.mxu0 0
      %517 = vmatpush2.bf16.xpose.msra.mxu0 0
      %518 = vmatprep.subr.bf16.mxu0 0
      %519 = vmatpush2.bf16.xpose.msra.mxu0 0
      %520 = vmatprep.subr.bf16.mxu0 0
      %521 = vmatpush2.bf16.xpose.msra.mxu0 0
      %522 = vmatprep.mubr.bf16.mxu0 0
      %523 = vmatmul.mubr.bf16.gmra.mxu0 %v485
      %v524 = vpop.f32.mrf.mxu0
      %v525 = vadd.f32 0.0, %v524
      %v526 = vpop.f32.mrf.mxu0
      %v527 = vpop.f32.mrf.mxu0
      %v528 = vpop.f32.mrf.mxu0
      %529 = vdwg.mxu0
      %v530 = vsel %vm119, %v525, -inf
      %531 = vmax.xlane.f32.xlu0 %v530
      %v532 = vpop.xlane.xlu0 %531
      %v533 = vsub.f32 %v525, %v532
      %v534 = vmul.f32 %v533, 1.442695
      %v535 = vpow.pop %v534
      %v536 = vsel %vm119, %v535, 0.0
      %537 = vadd.xlane.f32.xlu0 %v536
      %v538 = vpop.xlane.xlu0 %537
      %v539 = vpack.c.bf16 %v535, %v535
      %540 = vrot.lane.b32.xlu0 %v479, 40
      %v541 = vpop.permute.xlu0 %540
      %v543 = vsel %vm119, %v539, 0
      %v546 = vsel %vm181, %v541, 0
      %548 = vmatprep.subr.bf16.mxu0 0
      %549 = vmatpush1.bf16.msra.mxu0 0
      %550 = vmatprep.subr.bf16.mxu0 0
      %551 = vmatpush1.bf16.msra.mxu0 0
      %552 = vmatprep.subr.bf16.mxu0 0
      %553 = vmatpush1.bf16.msra.mxu0 0
      %554 = vmatprep.subr.bf16.mxu0 0
      %555 = vmatpush1.bf16.msra.mxu0 0
      %556 = vmatprep.subr.bf16.mxu0 0
      %557 = vmatpush1.bf16.msra.mxu0 0
      %558 = vmatprep.subr.bf16.mxu0 0
      %559 = vmatpush1.bf16.msra.mxu0 0
      %560 = vmatprep.subr.bf16.mxu0 0
      %561 = vmatpush1.bf16.msra.mxu0 0
      %562 = vmatprep.subr.bf16.mxu0 0
      %563 = vmatpush1.bf16.msra.mxu0 %v546
      %564 = vmatprep.subr.bf16.mxu0 0
      %565 = vmatpush2.bf16.msra.mxu0 0
      %566 = vmatprep.subr.bf16.mxu0 0
      %567 = vmatpush2.bf16.msra.mxu0 0
      %568 = vmatprep.subr.bf16.mxu0 0
      %569 = vmatpush2.bf16.msra.mxu0 0
      %570 = vmatprep.subr.bf16.mxu0 0
      %571 = vmatpush2.bf16.msra.mxu0 0
      %572 = vmatprep.subr.bf16.mxu0 0
      %573 = vmatpush2.bf16.msra.mxu0 0
      %574 = vmatprep.subr.bf16.mxu0 0
      %575 = vmatpush2.bf16.msra.mxu0 0
      %576 = vmatprep.subr.bf16.mxu0 0
      %577 = vmatpush2.bf16.msra.mxu0 0
      %578 = vmatprep.subr.bf16.mxu0 0
      %579 = vmatpush2.bf16.msra.mxu0 0
      %580 = vmatprep.mubr.bf16.mxu0 0
      %581 = vmatmul.mubr.bf16.gmra.mxu0 %v543
      %v582 = vpop.f32.mrf.mxu0
      %v583 = vadd.f32 0.0, %v582
      %v584 = vpop.f32.mrf.mxu0
      %v585 = vpop.f32.mrf.mxu0
      %v586 = vpop.f32.mrf.mxu0
      %587 = vdwg.mxu0
      %v588 = vrcp.pop %v538
      %v589 = vmul.f32 %v583, %v588
      %v590 = vpack.c.bf16 %v589, %v589
      %v592 = vunpack.c.l.b16 %v590
      %v593 = vpack.c.b16 %v592, %v592
      %594 = vrot.lane.b32.xlu0 %v593, 24
      %v595 = vpop.permute.xlu0 %594
      %vm597 = vcmask 257216
      %598 = vst.msk [vmem:[%s111] sm:$0xf] %vm597, %v595
      %p599 = scmp.lt.s32.totalorder %s12, 1
      %s600 = scalar_select %p599, %s12, 1
      %s601 = smul.addr %s600, 4
      %s602 = scalar_lea.vmem %s1, %s601
      // Predicated region
      $region25: #{bert_self_attention.3} parent=23 // pred_check
        %p603 = pneg %p56
      $region26: #{bert_self_attention.3} parent=23 // pred_check_branch
        %605 = sbr.rel (%p603) target = $region28
      $region27: #{bert_self_attention.3} parent=23 // pred_region
        _
      $region28: #{bert_self_attention.3} parent=23 // pred_fallthru
        _
    $region24: #{bert_self_attention.3} parent=5 // pred_fallthru
      _
    %p606 = scmp.le.s32.totalorder 2, %s7
    // Predicated region
    $region29: #{bert_self_attention.3} parent=5 // pred_check
      %p607 = pneg %p606
    $region30: #{bert_self_attention.3} parent=5 // pred_check_branch
      %609 = sbr.rel (%p607) target = $region32
    $region31: #{bert_self_attention.3} parent=5 // pred_region
      %s610 = ssub.s32 %s7, 2
      // Predicated region
      $region33: #{bert_self_attention.3} parent=31 // pred_check
        %p611 = pneg %p62
      $region34: #{bert_self_attention.3} parent=31 // pred_check_branch
        %613 = sbr.rel (%p611) target = $region36
      $region35: #{bert_self_attention.3} parent=31 // pred_region
        %p614 = scmp.lt.s32.totalorder %s13, 1
        %s615 = scalar_select %p614, %s13, 1
        %s616 = smul.addr %s615, 4
        %s617 = scalar_lea.vmem %s1, %s616
      $region36: #{bert_self_attention.3} parent=31 // pred_fallthru
        _
    $region32: #{bert_self_attention.3} parent=5 // pred_fallthru
      _
  $region6: #{bert_self_attention.3} parent=0 // loop_footer
    %s11 = sadd.s32 1, %s7
  $region7: #{bert_self_attention.3} parent=0 // loop_footer_branch
    %6 = sbr.rel target = $region3
  $region8: #{bert_self_attention.3} parent=0 // loop_exit
    _

</llo_original>
